<compile_context>
chip_gen: v7x
topology: tpu7x:2x2x1
jax: 0.10.0
libtpu: 0.0.40
codegen_flags: <defaults>
</compile_context>

<pallas_src>
import math

import jax
import jax.numpy as jnp
from jax.experimental import pallas as pl
from jax.experimental.pallas import tpu as pltpu


def gcn_kernel(a_ref, h_ref, p_ref, o_ref):
    # a_ref : (Bt, TM, N)       adjacency row tile (compute dtype)
    # h_ref : (Bt, N,  n_out)   H = X @ weight, full per batch (resident over i)
    # p_ref : (Bt, TM, n_out)   P row tile = X @ skip_weight (+ bias)
    # o_ref : (Bt, TM, n_out)
    bt = a_ref.shape[0]
    for bb in range(bt):  # Bt <= 8; body is a single MXU dot + VPU add
        acc = jnp.dot(a_ref[bb], h_ref[bb], preferred_element_type=jnp.float32)
        o_ref[bb] = (acc + p_ref[bb].astype(jnp.float32)).astype(o_ref.dtype)


def _round_up(x, m):
    return -(-x // m) * m


def _vmem_budgets():
    """(double-buffered A-tile budget, vmem_limit cap), generation-aware."""
    cap = 64 << 20  # conservative default (v7x per-TC VMEM)
    try:
        info = pltpu.get_tpu_info()
        cap = int(getattr(info, "vmem_capacity_bytes", cap))
    except Exception:
        pass
    if cap >= (96 << 20):          # v5e / v6e: 128 MiB physical VMEM
        a_budget = 40 << 20
    else:                          # v7x: 64 MiB per TensorCore
        a_budget = 16 << 20
    limit_cap = int(0.75 * cap)    # leave headroom for compiler scratch
    return a_budget, limit_cap


def _pick_row_tile(n_nodes, esize, a_tile_budget, sub):
    """Row tile TM (multiple of `sub`) whose double-buffered A tile fits budget."""
    if n_nodes <= 512:
        return _round_up(n_nodes, sub)     # whole graph per step
    for cand in (2048, 1024, 512, 256, 128, 64, 32, 16):
        if cand % sub:
            continue
        if 2 * cand * n_nodes * esize <= a_tile_budget:
            return cand
    return sub


def _pick_batch_pack(batch, n_nodes, n_out, tm, esize, row_steps):
    """Pack batches per grid step only on the tiny-graph path (amortize ~0.35us/step)."""
    if tm < n_nodes or n_nodes > 256:
        return 1
    per_batch = (2 * tm * n_nodes + n_nodes * n_out + 4 * tm * n_out) * esize
    cap = min(8, max(1, (8 << 20) // max(per_batch, 1)))  # bounded unroll
    # Keep >= 2 grid steps so v7x's second TensorCore is not idle.
    if row_steps == 1 and batch > 1:
        cap = min(cap, batch // 2)
    cap = max(cap, 1)
    for cand in range(min(batch, cap), 0, -1):
        if batch % cand == 0:
            return cand
    return 1


def gcn_layer(A, X, weight, skip_weight, bias=None, *, compute_dtype=jnp.bfloat16):
    """A: [B, N, N], X: [B, N, n_in] (or None -> identity) -> [B, N, n_out]."""
    B, N, _ = A.shape
    if X is None:
        X = jnp.broadcast_to(jnp.eye(N, dtype=A.dtype), (B, N, N))
    n_in, n_out = weight.shape
    out_dtype = jnp.result_type(X.dtype, weight.dtype)

    # Reassociation: out = A @ (X @ W) + (X @ Ws + b).
    hp = jax.lax.Precision.HIGHEST
    H = jnp.matmul(X, weight, precision=hp)
    P = jnp.matmul(X, skip_weight, precision=hp)
    if bias is not None:
        P = P + bias

    cdt = jnp.dtype(compute_dtype)
    esize = cdt.itemsize
    sub = max(8, 32 // esize)  # sublane multiple: 8 for f32, 16 for bf16

    a_budget, vmem_cap = _vmem_budgets()
    TM = _pick_row_tile(N, esize, a_budget, sub)
    N_rows = _round_up(N, TM)
    row_steps = N_rows // TM
    Bt = _pick_batch_pack(B, N, n_out, TM, esize, row_steps)

    # Cast the streamed operands to the compute dtype; pad only the node/row
    # axis (zeros), padded output rows are sliced off below.
    A_c = A.astype(cdt)
    H_c = H.astype(cdt)
    P_c = P.astype(cdt)
    if N_rows > N:
        A_c = jnp.pad(A_c, ((0, 0), (0, N_rows - N), (0, 0)))
        P_c = jnp.pad(P_c, ((0, 0), (0, N_rows - N), (0, 0)))

    # Scoped-VMEM estimate: double-buffered A / H / P tiles + output tile.
    est = (2 * esize * Bt * (TM * N + N * n_out + TM * n_out)
           + 2 * jnp.dtype(out_dtype).itemsize * Bt * TM * n_out)
    vmem_limit = int(min(vmem_cap, max(32 << 20, 2 * est)))

    grid = (B // Bt, row_steps)
    out = pl.pallas_call(
        gcn_kernel,
        out_shape=jax.ShapeDtypeStruct((B, N_rows, n_out), out_dtype),
        grid_spec=pltpu.PrefetchScalarGridSpec(
            num_scalar_prefetch=0,
            grid=grid,
            in_specs=[
                pl.BlockSpec((Bt, TM, N), lambda b, i: (b, i, 0)),      # A row tile
                pl.BlockSpec((Bt, N, n_out), lambda b, i: (b, 0, 0)),   # H (resident)
                pl.BlockSpec((Bt, TM, n_out), lambda b, i: (b, i, 0)),  # P row tile
            ],
            out_specs=pl.BlockSpec((Bt, TM, n_out), lambda b, i: (b, i, 0)),
        ),
        compiler_params=pltpu.CompilerParams(
            dimension_semantics=("parallel", "parallel"),
            vmem_limit_bytes=vmem_limit,
        ),
    )(A_c, H_c, P_c)

    return out[:, :N, :] if N_rows > N else out


def gcn_reference(A, X, weight, skip_weight, bias):
    hp = jax.lax.Precision.HIGHEST
    agg = jnp.matmul(jnp.matmul(A, X, precision=hp), weight, precision=hp)
    skip = jnp.matmul(X, skip_weight, precision=hp)
    return skip + agg + bias


if __name__ == "__main__":
    key = jax.random.PRNGKey(0)
    B, N, n_in, n_out = 2, 16, 8, 32

    k_a, k_x, k_w, k_ws, k_b = jax.random.split(key, 5)

    # Deterministic parameter init mirroring reset_parameters():
    # uniform(-stdv, stdv), stdv = 1/sqrt(n_out)
    stdv = 1.0 / math.sqrt(n_out)
    weight = jax.random.uniform(k_w, (n_in, n_out), jnp.float32, -stdv, stdv)
    skip_weight = jax.random.uniform(k_ws, (n_in, n_out), jnp.float32, -stdv, stdv)
    bias = jax.random.uniform(k_b, (n_out,), jnp.float32, -stdv, stdv)

    # Example inputs: row-normalized adjacency and node features.
    A_raw = jax.random.uniform(k_a, (B, N, N), jnp.float32)
    A = A_raw / jnp.sum(A_raw, axis=-1, keepdims=True)
    X = jax.random.normal(k_x, (B, N, n_in), jnp.float32)

    ref = gcn_reference(A, X, weight, skip_weight, bias)

    # Full-precision path: tight check of the kernel math (reassociated).
    out_f32 = jax.block_until_ready(
        gcn_layer(A, X, weight, skip_weight, bias, compute_dtype=jnp.float32))
    assert out_f32.shape == (B, N, n_out)
    assert jnp.allclose(out_f32, ref, atol=1e-4, rtol=1e-4)

    # Default bandwidth-optimized path (A/H/P streamed as bf16, f32 accumulate).
    out_bf16 = jax.block_until_ready(gcn_layer(A, X, weight, skip_weight, bias))
    assert out_bf16.shape == (B, N, n_out)
    assert jnp.allclose(out_bf16, ref, atol=5e-2, rtol=5e-2)

    print("KERNEL_OK")
</pallas_src>

<mosaic_0001>
module attributes {stable_mosaic.version = 11 : i64} {
  func.func @gcn_kernel(%arg0: i32, %arg1: i32, %arg2: memref<1x16x16xf32, #tpu.memory_space<vmem>>, %arg3: memref<1x16x32xf32, #tpu.memory_space<vmem>>, %arg4: memref<1x16x32xf32, #tpu.memory_space<vmem>>, %arg5: memref<1x16x32xf32, #tpu.memory_space<vmem>>) attributes {dimension_semantics = [#tpu.dimension_semantics<parallel>, #tpu.dimension_semantics<parallel>], iteration_bounds = array<i64: 2, 1>, scalar_prefetch = 0 : i64, scratch_operands = 0 : i64, tpu.core_type = #tpu.core_type<tc>, window_params = [{transform_indices = @transform_0, window_bounds = array<i64: 1, 16, 16>}, {transform_indices = @transform_1, window_bounds = array<i64: 1, 16, 32>}, {transform_indices = @transform_2, window_bounds = array<i64: 1, 16, 32>}, {transform_indices = @transform_3, window_bounds = array<i64: 1, 16, 32>}]} {
    %c0 = arith.constant 0 : index
    %c0_0 = arith.constant 0 : index
    %c0_1 = arith.constant 0 : index
    %0 = vector.load %arg2[%c0, %c0_0, %c0_1] : memref<1x16x16xf32, #tpu.memory_space<vmem>>, vector<1x16x16xf32>
    %1 = vector.shape_cast %0 : vector<1x16x16xf32> to vector<16x16xf32>
    %c0_2 = arith.constant 0 : index
    %c0_3 = arith.constant 0 : index
    %c0_4 = arith.constant 0 : index
    %2 = vector.load %arg3[%c0_2, %c0_3, %c0_4] : memref<1x16x32xf32, #tpu.memory_space<vmem>>, vector<1x16x32xf32>
    %3 = vector.shape_cast %2 : vector<1x16x32xf32> to vector<16x32xf32>
    %cst = arith.constant dense<0.000000e+00> : vector<16x32xf32>
    %4 = tpu.matmul %1, %3, %cst {dimension_numbers = #tpu.dot_dimension_numbers<[1], [0], [0], [1], [0, 0, 1, 1], [], []>} : vector<16x16xf32>, vector<16x32xf32>, vector<16x32xf32> -> vector<16x32xf32>
    %c0_5 = arith.constant 0 : index
    %c0_6 = arith.constant 0 : index
    %c0_7 = arith.constant 0 : index
    %5 = vector.load %arg4[%c0_5, %c0_6, %c0_7] : memref<1x16x32xf32, #tpu.memory_space<vmem>>, vector<1x16x32xf32>
    %6 = vector.shape_cast %5 : vector<1x16x32xf32> to vector<16x32xf32>
    %7 = arith.addf %4, %6 : vector<16x32xf32>
    %c0_8 = arith.constant 0 : index
    %c0_9 = arith.constant 0 : index
    %c0_10 = arith.constant 0 : index
    %8 = vector.load %arg5[%c0_8, %c0_9, %c0_10] : memref<1x16x32xf32, #tpu.memory_space<vmem>>, vector<1x16x32xf32>
    %9 = vector.shape_cast %8 : vector<1x16x32xf32> to vector<16x32xf32>
    %10 = vector.shape_cast %7 : vector<16x32xf32> to vector<1x16x32xf32>
    tpu.vector_store %arg5[%c0_8, %c0_9, %c0_10], %10 {strides = array<i32>} : memref<1x16x32xf32, #tpu.memory_space<vmem>>, vector<1x16x32xf32>,
    return
  }
  func.func @transform_0(%arg0: i32, %arg1: i32) -> (i32, i32, i32) {
    %c0_i32 = arith.constant 0 : i32
    %c0_i32_0 = arith.constant 0 : i32
    return %arg0, %arg1, %c0_i32 : i32, i32, i32
  }
  func.func @transform_1(%arg0: i32, %arg1: i32) -> (i32, i32, i32) {
    %c0_i32 = arith.constant 0 : i32
    %c0_i32_0 = arith.constant 0 : i32
    %c0_i32_1 = arith.constant 0 : i32
    return %arg0, %c0_i32, %c0_i32_0 : i32, i32, i32
  }
  func.func @transform_2(%arg0: i32, %arg1: i32) -> (i32, i32, i32) {
    %c0_i32 = arith.constant 0 : i32
    %c0_i32_0 = arith.constant 0 : i32
    return %arg0, %arg1, %c0_i32 : i32, i32, i32
  }
  func.func @transform_3(%arg0: i32, %arg1: i32) -> (i32, i32, i32) {
    %c0_i32 = arith.constant 0 : i32
    %c0_i32_0 = arith.constant 0 : i32
    return %arg0, %arg1, %c0_i32 : i32, i32, i32
  }
}

</mosaic_0001>

<llo_original>
// kernel: tpu_custom_call.1
$region0: #{tpu_custom_call.1}
  #allocation0 [shape = 'u32[]', space=smem, size = 0x4, offset = 0x4, fixed_abs, tag = 'smem constant byte address 0x4 - core index']
  #allocation1 [shape = 'u32[144,128]{1,0:T(1,128)}', space=vmem, size = 0x12000, scoped, tag = 'internal scratch']
  %s0 = inlined_call_operand.hbm [shape: f32[2,16,16], index: 0, kind: input, shape index: {}]
  %s1 = inlined_call_operand.hbm [shape: f32[2,16,32], index: 1, kind: input, shape index: {}]
  %s2 = inlined_call_operand.hbm [shape: f32[2,16,32], index: 2, kind: input, shape index: {}]
  %s3 = inlined_call_operand.hbm [shape: f32[2,16,32], index: 3, kind: output, shape index: {}]
  %s4 = sld [smem:[#allocation0]]
  $region57: #{tpu_custom_call.1} parent=0
    _
  %s6 = ssub.s32 1, %s4
  %s7 = scalar_select 0, %s6, %s4
  $region1: #{tpu_custom_call.1} parent=0
    #allocation2 [shape = 'u8[16384]{0}', space=vmem, size = 0x4000, scoped, tag = 'input window, operand 0']
    #allocation3 [shape = 's32[2]{0}', space=sflag, size = 0x8, scoped, tag = 'scoped memory for tpu_custom_call.1']
    #allocation4 [shape = 's32[2]{0}', space=sflag, size = 0x8, scoped, tag = 'scoped memory for tpu_custom_call.1']
    #allocation5 [shape = 'u8[16384]{0}', space=vmem, size = 0x4000, scoped, tag = 'input window, operand 1']
    #allocation6 [shape = 's32[2]{0}', space=sflag, size = 0x8, scoped, tag = 'scoped memory for tpu_custom_call.1']
    #allocation7 [shape = 'u8[16384]{0}', space=vmem, size = 0x4000, scoped, tag = 'input window, operand 2']
    #allocation8 [shape = 'u8[16384]{0}', space=vmem, size = 0x4000, scoped, tag = 'output window, operand 0']
    %8 = vsyncpa [#allocation3], 0
    %s9 = scalar_lea.sflag [#allocation3], 1
    %10 = vsyncpa %s9, 0
    %11 = vsyncpa [#allocation6], 0
    %s12 = scalar_lea.sflag [#allocation6], 1
    %13 = vsyncpa %s12, 0
    %14 = vsyncpa [#allocation4], 0
    %s15 = scalar_lea.sflag [#allocation4], 1
    %16 = vsyncpa %s15, 0
    loop: start=0, step=1, limit=4
    $region2: #{tpu_custom_call.1} parent=1 // loop_pre_header
      _
    $region3: #{tpu_custom_call.1} parent=1 // loop_header
      %s18 = sphi 0, %s22
      %p19 = scmp.ge.s32.totalorder %s18, 4
      %s25 = sphi 0, %s37
      %s26 = sphi 0, %s33
      %s27 = sphi 0, %s25
      %s28 = sphi 0, %s26
      %s29 = sphi 0, %s27
      %s30 = sphi 0, %s28
      %s42 = sphi 0, %s44
      %s45 = sphi 0, %s42
      %s46 = sphi 0, %s45
      %s62 = sphi 0, %s46
      %s68 = sphi 0, %s70
      %s71 = sphi 0, %s68
      %s72 = sphi 0, %s71
      %s88 = sphi 0, %s72
      %s96 = sphi 0, %s98
      %s99 = sphi 0, %s96
      %s100 = sphi 0, %s99
      %s116 = sphi 0, %s100
      %s124 = sphi 0, %s126
      %s127 = sphi 0, %s124
      %s128 = sphi 0, %s127
      %s144 = sphi 0, %s128
    $region4: #{tpu_custom_call.1} parent=1 // loop_header_branch
      %21 = sbr.rel (%p19) target = $region8
    $region5: #{tpu_custom_call.1} parent=1 // loop_body
      %s23 = ssub.s32 %s18, 1
      %s24 = ssub.s32 %s18, 2
      %s31 = sadd.s32 1, %s26
      %p32 = scmp.ge.s32.totalorder %s31, 1
      %s33 = scalar_select %p32, 0, %s31
      %s34 = sadd.s32 1, %s25
      %s35 = scalar_select %p32, %s34, %s25
      %p36 = scmp.ge.s32.totalorder %s35, 2
      %s37 = scalar_select %p36, 0, %s35
      %s38 = ssub.s32 %s25, %s37
      %s39 = ssub.s32 %s26, %s33
      %s40 = sor.u32 %s38, %s39
      %p41 = scmp.eq.s32.totalorder %s40, 0
      %s43 = sadd.s32 %s42, 1
      %s44 = scalar_select %p41, %s42, %s43
      %p47 = pneg %p41
      %p48 = scmp.eq.s32.totalorder %s18, 1
      %p49 = por %p47, %p48
      %p50 = scmp.ne.s32.totalorder %s42, %s45
      %p51 = scmp.eq.s32.totalorder %s18, 0
      %p52 = por %p50, %p51
      %p53 = scmp.ne.s32.totalorder %s42, %s45
      %p54 = scmp.eq.s32.totalorder %s23, 1
      %p55 = por %p53, %p54
      %p56 = scmp.ne.s32.totalorder %s45, %s46
      %p57 = scmp.eq.s32.totalorder %s23, 0
      %p58 = por %p56, %p57
      %p59 = scmp.ne.s32.totalorder %s45, %s46
      %p60 = scmp.eq.s32.totalorder %s24, 1
      %p61 = por %p59, %p60
      %p63 = scmp.ne.s32.totalorder %s46, %s62
      %p64 = scmp.eq.s32.totalorder %s24, 0
      %p65 = por %p63, %p64
      %s66 = ssub.s32 %s25, %s37
      %p67 = scmp.eq.s32.totalorder %s66, 0
      %s69 = sadd.s32 %s68, 1
      %s70 = scalar_select %p67, %s68, %s69
      %p73 = pneg %p67
      %p74 = scmp.eq.s32.totalorder %s18, 1
      %p75 = por %p73, %p74
      %p76 = scmp.ne.s32.totalorder %s68, %s71
      %p77 = scmp.eq.s32.totalorder %s18, 0
      %p78 = por %p76, %p77
      %p79 = scmp.ne.s32.totalorder %s68, %s71
      %p80 = scmp.eq.s32.totalorder %s23, 1
      %p81 = por %p79, %p80
      %p82 = scmp.ne.s32.totalorder %s71, %s72
      %p83 = scmp.eq.s32.totalorder %s23, 0
      %p84 = por %p82, %p83
      %p85 = scmp.ne.s32.totalorder %s71, %s72
      %p86 = scmp.eq.s32.totalorder %s24, 1
      %p87 = por %p85, %p86
      %p89 = scmp.ne.s32.totalorder %s72, %s88
      %p90 = scmp.eq.s32.totalorder %s24, 0
      %p91 = por %p89, %p90
      %s92 = ssub.s32 %s25, %s37
      %s93 = ssub.s32 %s26, %s33
      %s94 = sor.u32 %s92, %s93
      %p95 = scmp.eq.s32.totalorder %s94, 0
      %s97 = sadd.s32 %s96, 1
      %s98 = scalar_select %p95, %s96, %s97
      %p101 = pneg %p95
      %p102 = scmp.eq.s32.totalorder %s18, 1
      %p103 = por %p101, %p102
      %p104 = scmp.ne.s32.totalorder %s96, %s99
      %p105 = scmp.eq.s32.totalorder %s18, 0
      %p106 = por %p104, %p105
      %p107 = scmp.ne.s32.totalorder %s96, %s99
      %p108 = scmp.eq.s32.totalorder %s23, 1
      %p109 = por %p107, %p108
      %p110 = scmp.ne.s32.totalorder %s99, %s100
      %p111 = scmp.eq.s32.totalorder %s23, 0
      %p112 = por %p110, %p111
      %p113 = scmp.ne.s32.totalorder %s99, %s100
      %p114 = scmp.eq.s32.totalorder %s24, 1
      %p115 = por %p113, %p114
      %p117 = scmp.ne.s32.totalorder %s100, %s116
      %p118 = scmp.eq.s32.totalorder %s24, 0
      %p119 = por %p117, %p118
      %s120 = ssub.s32 %s25, %s37
      %s121 = ssub.s32 %s26, %s33
      %s122 = sor.u32 %s120, %s121
      %p123 = scmp.eq.s32.totalorder %s122, 0
      %s125 = sadd.s32 %s124, 1
      %s126 = scalar_select %p123, %s124, %s125
      %p129 = pneg %p123
      %p130 = scmp.eq.s32.totalorder %s18, 1
      %p131 = por %p129, %p130
      %p132 = scmp.ne.s32.totalorder %s124, %s127
      %p133 = scmp.eq.s32.totalorder %s18, 0
      %p134 = por %p132, %p133
      %p135 = scmp.ne.s32.totalorder %s124, %s127
      %p136 = scmp.eq.s32.totalorder %s23, 1
      %p137 = por %p135, %p136
      %p138 = scmp.ne.s32.totalorder %s127, %s128
      %p139 = scmp.eq.s32.totalorder %s23, 0
      %p140 = por %p138, %p139
      %p141 = scmp.ne.s32.totalorder %s127, %s128
      %p142 = scmp.eq.s32.totalorder %s24, 1
      %p143 = por %p141, %p142
      %p145 = scmp.ne.s32.totalorder %s128, %s144
      %p146 = scmp.eq.s32.totalorder %s24, 0
      %p147 = por %p145, %p146
      %p148 = scmp.le.s32.totalorder 1, %s18
      %p149 = scmp.lt.s32.totalorder %s18, 3
      %p150 = pnand %p148, %p149
      %p151 = pneg %p150
      // Predicated region
      $region9: #{tpu_custom_call.1} parent=5 // pred_check
        _
      $region10: #{tpu_custom_call.1} parent=5 // pred_check_branch
        %153 = sbr.rel (%p150) target = $region12
      $region11: #{tpu_custom_call.1} parent=5 // pred_region
        %s154 = ssub.s32 %s18, 1
      $region12: #{tpu_custom_call.1} parent=5 // pred_fallthru
        _
      %p155 = scmp.lt.s32.totalorder %s18, 2
      // Predicated region
      $region13: #{tpu_custom_call.1} parent=5 // pred_check
        %p156 = pneg %p155
      $region14: #{tpu_custom_call.1} parent=5 // pred_check_branch
        %158 = sbr.rel (%p156) target = $region16
      $region15: #{tpu_custom_call.1} parent=5 // pred_region
        // Predicated region
        $region17: #{tpu_custom_call.1} parent=15 // pred_check
          %p159 = pneg %p52
        $region18: #{tpu_custom_call.1} parent=15 // pred_check_branch
          %161 = sbr.rel (%p159) target = $region20
        $region19: #{tpu_custom_call.1} parent=15 // pred_region
          %s162 = sand.u32 %s42, 1
          %s163 = scalar_lea.sflag [#allocation3], %s162
          %s164 = sand.u32 %s42, 1
          %s165 = smul.addr %s164, 16
          %s166 = scalar_lea.vmem [#allocation2], %s165
          %s167 = smul.u32 2, %s26
          %s169 = ssub.s32 256, 256
          %170 = vsyncadd %s163, %s169
          %s171 = smul.addr %s25, 2
          %s172 = sadd.s32 %s167, %s171
          %s173 = smul.addr %s172, 128
          %s174 = scalar_lea.hbm %s0, %s173
          %s175 = sshll.u32 %s166, 4
          %s176 = int_to_ptr.vmem [resolvable:$true] %s175
          %181 = dma.hbm_to_vmem [thread:$0]  %s174, 256, %s176, %s163, 128, 128, 8
        $region20: #{tpu_custom_call.1} parent=15 // pred_fallthru
          _
        // Predicated region
        $region21: #{tpu_custom_call.1} parent=15 // pred_check
          %p182 = pneg %p78
        $region22: #{tpu_custom_call.1} parent=15 // pred_check_branch
          %184 = sbr.rel (%p182) target = $region24
        $region23: #{tpu_custom_call.1} parent=15 // pred_region
          %s185 = sand.u32 %s18, 1
          %s186 = scalar_lea.sflag [#allocation6], %s185
          %s187 = sand.u32 %s68, 1
          %s188 = smul.addr %s187, 16
          %s189 = scalar_lea.vmem [#allocation5], %s188
          %s191 = ssub.s32 256, 256
          %192 = vsyncadd %s186, %s191
          %s193 = smul.addr %s25, 2
          %s194 = smul.addr %s193, 128
          %s195 = scalar_lea.hbm %s1, %s194
          %s196 = sshll.u32 %s189, 4
          %s197 = int_to_ptr.vmem [resolvable:$true] %s196
          %202 = dma.hbm_to_vmem [thread:$0]  %s195, 256, %s197, %s186, 128, 128, 8
        $region24: #{tpu_custom_call.1} parent=15 // pred_fallthru
          _
        // Predicated region
        $region25: #{tpu_custom_call.1} parent=15 // pred_check
          %p203 = pneg %p106
        $region26: #{tpu_custom_call.1} parent=15 // pred_check_branch
          %205 = sbr.rel (%p203) target = $region28
        $region27: #{tpu_custom_call.1} parent=15 // pred_region
          %s206 = sand.u32 %s18, 1
          %s207 = scalar_lea.sflag [#allocation6], %s206
          %s208 = sand.u32 %s96, 1
          %s209 = smul.addr %s208, 16
          %s210 = scalar_lea.vmem [#allocation7], %s209
          %s211 = smul.u32 2, %s26
          %s213 = ssub.s32 256, 256
          %214 = vsyncadd %s207, %s213
          %s215 = smul.addr %s25, 2
          %s216 = sadd.s32 %s211, %s215
          %s217 = smul.addr %s216, 128
          %s218 = scalar_lea.hbm %s2, %s217
          %s219 = sshll.u32 %s210, 4
          %s220 = int_to_ptr.vmem [resolvable:$true] %s219
          %225 = dma.hbm_to_vmem [thread:$0]  %s218, 256, %s220, %s207, 128, 128, 8
        $region28: #{tpu_custom_call.1} parent=15 // pred_fallthru
          _
      $region16: #{tpu_custom_call.1} parent=5 // pred_fallthru
        _
      %p226 = scmp.le.s32.totalorder 1, %s18
      %p227 = scmp.lt.s32.totalorder %s18, 3
      %p228 = pnand %p226, %p227
      %p229 = pneg %p228
      // Predicated region
      $region29: #{tpu_custom_call.1} parent=5 // pred_check
        _
      $region30: #{tpu_custom_call.1} parent=5 // pred_check_branch
        %231 = sbr.rel (%p228) target = $region32
      $region31: #{tpu_custom_call.1} parent=5 // pred_region
        %s232 = ssub.s32 %s18, 1
        %s233 = sand.u32 %s45, 1
        %s234 = scalar_lea.sflag [#allocation3], %s233
        %s235 = sand.u32 %s45, 1
        %s236 = smul.addr %s235, 16
        %s237 = scalar_lea.vmem [#allocation2], %s236
        // Predicated region
        $region33: #{tpu_custom_call.1} parent=31 // pred_check
          %p238 = pneg %p58
        $region34: #{tpu_custom_call.1} parent=31 // pred_check_branch
          %240 = sbr.rel (%p238) target = $region36
        $region35: #{tpu_custom_call.1} parent=31 // pred_region
          %241 = dma.done %s234, 256
        $region36: #{tpu_custom_call.1} parent=31 // pred_fallthru
          _
        %s242 = sand.u32 %s23, 1
        %s243 = scalar_lea.sflag [#allocation6], %s242
        %s244 = sand.u32 %s71, 1
        %s245 = smul.addr %s244, 16
        %s246 = scalar_lea.vmem [#allocation5], %s245
        // Predicated region
        $region37: #{tpu_custom_call.1} parent=31 // pred_check
          %p247 = pneg %p84
        $region38: #{tpu_custom_call.1} parent=31 // pred_check_branch
          %249 = sbr.rel (%p247) target = $region40
        $region39: #{tpu_custom_call.1} parent=31 // pred_region
          %250 = dma.done %s243, 256
        $region40: #{tpu_custom_call.1} parent=31 // pred_fallthru
          _
        %s251 = sand.u32 %s23, 1
        %s252 = scalar_lea.sflag [#allocation6], %s251
        %s253 = sand.u32 %s99, 1
        %s254 = smul.addr %s253, 16
        %s255 = scalar_lea.vmem [#allocation7], %s254
        // Predicated region
        $region41: #{tpu_custom_call.1} parent=31 // pred_check
          %p256 = pneg %p112
        $region42: #{tpu_custom_call.1} parent=31 // pred_check_branch
          %258 = sbr.rel (%p256) target = $region44
        $region43: #{tpu_custom_call.1} parent=31 // pred_region
          %259 = dma.done %s252, 256
        $region44: #{tpu_custom_call.1} parent=31 // pred_fallthru
          _
        %s260 = sand.u32 %s45, 1
        %s261 = scalar_lea.sflag [#allocation3], %s260
        %s262 = sand.u32 %s45, 1
        %s263 = smul.addr %s262, 16
        %s264 = scalar_lea.vmem [#allocation2], %s263
        %p265 = pneg %p58
        %p266 = pneg %p55
        %s267 = sand.u32 %s23, 1
        %s268 = scalar_lea.sflag [#allocation6], %s267
        %s269 = sand.u32 %s71, 1
        %s270 = smul.addr %s269, 16
        %s271 = scalar_lea.vmem [#allocation5], %s270
        %p272 = pneg %p84
        %p273 = pneg %p81
        %s274 = sand.u32 %s23, 1
        %s275 = scalar_lea.sflag [#allocation6], %s274
        %s276 = sand.u32 %s99, 1
        %s277 = smul.addr %s276, 16
        %s278 = scalar_lea.vmem [#allocation7], %s277
        %p279 = pneg %p112
        %p280 = pneg %p109
        %p281 = pneg %p140
        %p282 = pneg %p137
        %s283 = sand.u32 %s127, 1
        %s284 = scalar_lea.sflag [#allocation4], %s283
        %s285 = sand.u32 %s127, 1
        %s286 = smul.addr %s285, 16
        %s287 = scalar_lea.vmem [#allocation8], %s286
        %s288 = smul.u32 2, %s28
        %s289 = smul.u32 2, %s28
        %s290 = smul.u32 2, %s28
        %v291 = vld [vmem:[%s237] sm:$0xff]
        %v292 = vld [vmem:[%s237 + $0x8] sm:$0xff]
        %v293 = vld [vmem:[%s246] sm:$0xff]
        %v294 = vld [vmem:[%s246 + $0x8] sm:$0xff]
        %v295 = vld [vmem:[%s255] sm:$0xff]
        %v296 = vld [vmem:[%s255 + $0x8] sm:$0xff]
        %vm297 = vcmask 130048
        %v299 = vsel %vm297, %v291, 0
        %v302 = vsel %vm297, %v292, 0
        %304 = vmatprep.subr.mxu0 0.0
        %305 = vmatpush1.msra.mxu0 %v293
        %306 = vmatprep.subr.mxu0 0.0
        %307 = vmatpush1.msra.mxu0 %v294
        %308 = vmatprep.subr.mxu0 0.0
        %309 = vmatpush1.msra.mxu0 0.0
        %310 = vmatprep.subr.mxu0 0.0
        %311 = vmatpush1.msra.mxu0 0.0
        %312 = vmatprep.subr.mxu0 0.0
        %313 = vmatpush1.msra.mxu0 0.0
        %314 = vmatprep.subr.mxu0 0.0
        %315 = vmatpush1.msra.mxu0 0.0
        %316 = vmatprep.subr.mxu0 0.0
        %317 = vmatpush1.msra.mxu0 0.0
        %318 = vmatprep.subr.mxu0 0.0
        %319 = vmatpush1.msra.mxu0 0.0
        %320 = vmatprep.subr.mxu0 0.0
        %321 = vmatpush1.msra.mxu0 0.0
        %322 = vmatprep.subr.mxu0 0.0
        %323 = vmatpush1.msra.mxu0 0.0
        %324 = vmatprep.subr.mxu0 0.0
        %325 = vmatpush1.msra.mxu0 0.0
        %326 = vmatprep.subr.mxu0 0.0
        %327 = vmatpush1.msra.mxu0 0.0
        %328 = vmatprep.subr.mxu0 0.0
        %329 = vmatpush1.msra.mxu0 0.0
        %330 = vmatprep.subr.mxu0 0.0
        %331 = vmatpush1.msra.mxu0 0.0
        %332 = vmatprep.subr.mxu0 0.0
        %333 = vmatpush1.msra.mxu0 0.0
        %334 = vmatprep.subr.mxu0 0.0
        %335 = vmatpush1.msra.mxu0 0.0
        %336 = vmatprep.subr.mxu0 0.0
        %337 = vmatpush1.msra.mxu0 0.0
        %338 = vmatprep.subr.mxu0 0.0
        %339 = vmatpush1.msra.mxu0 0.0
        %340 = vmatprep.subr.mxu0 0.0
        %341 = vmatpush1.msra.mxu0 0.0
        %342 = vmatprep.subr.mxu0 0.0
        %343 = vmatpush1.msra.mxu0 0.0
        %344 = vmatprep.subr.mxu0 0.0
        %345 = vmatpush1.msra.mxu0 0.0
        %346 = vmatprep.subr.mxu0 0.0
        %347 = vmatpush1.msra.mxu0 0.0
        %348 = vmatprep.subr.mxu0 0.0
        %349 = vmatpush1.msra.mxu0 0.0
        %350 = vmatprep.subr.mxu0 0.0
        %351 = vmatpush1.msra.mxu0 0.0
        %352 = vmatprep.subr.mxu0 0.0
        %353 = vmatpush1.msra.mxu0 0.0
        %354 = vmatprep.subr.mxu0 0.0
        %355 = vmatpush1.msra.mxu0 0.0
        %356 = vmatprep.subr.mxu0 0.0
        %357 = vmatpush1.msra.mxu0 0.0
        %358 = vmatprep.subr.mxu0 0.0
        %359 = vmatpush1.msra.mxu0 0.0
        %360 = vmatprep.subr.mxu0 0.0
        %361 = vmatpush1.msra.mxu0 0.0
        %362 = vmatprep.subr.mxu0 0.0
        %363 = vmatpush1.msra.mxu0 0.0
        %364 = vmatprep.subr.mxu0 0.0
        %365 = vmatpush1.msra.mxu0 0.0
        %366 = vmatprep.subr.mxu0 0.0
        %367 = vmatpush1.msra.mxu0 0.0
        %368 = vmatprep.mubr.f32.mxu0 0.0
        %369 = vmatmul.mubr.f32.gmra.mrb[0].mxu0 %v299
        %v370 = vpop.f32.mrb[0].mxu0
        %v371 = vadd.f32 %v295, %v370
        %v372 = vpop.f32.mrb[0].mxu0
        %373 = vmatprep.mubr.f32.mxu0 0.0
        %374 = vmatmul.mubr.f32.gmra.mrb[0].mxu0 %v302
        %v375 = vpop.f32.mrb[0].mxu0
        %v376 = vadd.f32 %v296, %v375
        %v377 = vpop.f32.mrb[0].mxu0
        %378 = vdwg.mxu0
        %vm379 = vcmask 261120
        %380 = vst.msk [vmem:[%s287] sm:$0xff] %vm379, %v371
        %381 = vst.msk [vmem:[%s287 + $0x8] sm:$0xff] %vm379, %v376
        %s382 = sand.u32 %s127, 1
        %s383 = scalar_lea.sflag [#allocation4], %s382
        %s384 = sand.u32 %s127, 1
        %s385 = smul.addr %s384, 16
        %s386 = scalar_lea.vmem [#allocation8], %s385
        // Predicated region
        $region45: #{tpu_custom_call.1} parent=31 // pred_check
          %p387 = pneg %p137
        $region46: #{tpu_custom_call.1} parent=31 // pred_check_branch
          %389 = sbr.rel (%p387) target = $region48
        $region47: #{tpu_custom_call.1} parent=31 // pred_region
          %s390 = smul.u32 2, %s28
          %s392 = ssub.s32 256, 256
          %393 = vsyncadd %s383, %s392
          %s394 = smul.addr %s27, 2
          %s395 = sadd.s32 %s390, %s394
          %s396 = smul.addr %s395, 128
          %s397 = scalar_lea.hbm %s3, %s396
          %s398 = sshll.u32 %s386, 4
          %s399 = int_to_ptr.vmem [resolvable:$true] %s398
          %404 = dma.vmem_to_hbm [thread:$0]  %s399, 256, %s397, %s383, 128, 128, 8
        $region48: #{tpu_custom_call.1} parent=31 // pred_fallthru
          _
      $region32: #{tpu_custom_call.1} parent=5 // pred_fallthru
        _
      %p405 = scmp.le.s32.totalorder 2, %s18
      // Predicated region
      $region49: #{tpu_custom_call.1} parent=5 // pred_check
        %p406 = pneg %p405
      $region50: #{tpu_custom_call.1} parent=5 // pred_check_branch
        %408 = sbr.rel (%p406) target = $region52
      $region51: #{tpu_custom_call.1} parent=5 // pred_region
        %s409 = ssub.s32 %s18, 2
        // Predicated region
        $region53: #{tpu_custom_call.1} parent=51 // pred_check
          %p410 = pneg %p143
        $region54: #{tpu_custom_call.1} parent=51 // pred_check_branch
          %412 = sbr.rel (%p410) target = $region56
        $region55: #{tpu_custom_call.1} parent=51 // pred_region
          %s413 = sand.u32 %s128, 1
          %s414 = scalar_lea.sflag [#allocation4], %s413
          %s415 = sand.u32 %s128, 1
          %s416 = smul.addr %s415, 16
          %s417 = scalar_lea.vmem [#allocation8], %s416
          %418 = dma.done %s414, 256
        $region56: #{tpu_custom_call.1} parent=51 // pred_fallthru
          _
      $region52: #{tpu_custom_call.1} parent=5 // pred_fallthru
        _
    $region6: #{tpu_custom_call.1} parent=1 // loop_footer
      %s22 = sadd.s32 1, %s18
    $region7: #{tpu_custom_call.1} parent=1 // loop_footer_branch
      %17 = sbr.rel target = $region3
    $region8: #{tpu_custom_call.1} parent=1 // loop_exit
      _
    %419 = vsyncpa [#allocation3], 1
    %s420 = scalar_lea.sflag [#allocation3], 1
    %421 = vsyncpa %s420, 1
    %422 = vsyncpa [#allocation6], 1
    %s423 = scalar_lea.sflag [#allocation6], 1
    %424 = vsyncpa %s423, 1
    %425 = vsyncpa [#allocation4], 1
    %s426 = scalar_lea.sflag [#allocation4], 1
    %427 = vsyncpa %s426, 1

</llo_original>
